<compile_context>
chip_gen: v7x
topology: tpu7x:2x2x1
jax: 0.10.0
libtpu: 0.0.40
codegen_flags: <defaults>
</compile_context>

<pallas_src>
import functools

import jax
import jax.numpy as jnp
from jax.experimental import pallas as pl
from jax.experimental.pallas import tpu as pltpu


HIDDEN = 256      # fc1/fc2 output width
OUT_PAD = 128     # fc3 output padded from 1 -> 128 lanes (lane-dense stores)


def _critic_kernel(s_ref, a_ref, w1s_ref, w1a_ref, w2_ref, w3_ref, b_ref, out_ref):
    """Fused 3-layer MLP on one batch tile.

    s_ref:  (TB, S)        a_ref:  (TB, A)
    w1s:    (S, 256)       w1a:    (A, 256)
    w2:     (256, 256)     w3:     (256, 128)  (cols 1..127 are zero)
    b_ref:  (3, 256)       row0=b1, row1=b2, row2[:128]=padded b3
    out:    (TB, 128)      column 0 holds the Q-value
    """
    # Layer 1: split dot replaces the concat([state, action]) @ W1.
    h1 = jnp.dot(s_ref[...], w1s_ref[...], preferred_element_type=jnp.float32)
    h1 = h1 + jnp.dot(a_ref[...], w1a_ref[...], preferred_element_type=jnp.float32)
    h1 = jnp.maximum(h1 + b_ref[0:1, :], 0.0)                       # ReLU (f32 VPU)

    # Layer 2.
    h2 = jnp.dot(h1, w2_ref[...], preferred_element_type=jnp.float32)
    h2 = jnp.maximum(h2 + b_ref[1:2, :], 0.0)                       # ReLU

    # Layer 3: (256,128) padded matmul -> lane-dense (TB,128) store.
    q = jnp.dot(h2, w3_ref[...], preferred_element_type=jnp.float32)
    out_ref[...] = (q + b_ref[2:3, :OUT_PAD]).astype(out_ref.dtype)


@functools.partial(jax.jit, static_argnames=("block_b",))
def critic_forward(state, action, params, *, block_b=1024):
    """state: (B, S) f32, action: (B, A) f32 -> (B, 1) f32."""
    w1s, w1a, w2, w3p, biases = params
    B, S = state.shape
    A = action.shape[1]

    # Batch tile: full batch when small (block == full dim is always legal),
    # otherwise a multiple-of-8 tile; tail block is handled by Pallas masking.
    tb = B if B <= block_b else block_b
    grid = (pl.cdiv(B, tb),)

    flops = 2 * B * HIDDEN * (S + A + HIDDEN + OUT_PAD)
    bytes_accessed = 4 * (
        B * (S + A)                                   # activations in
        + S * HIDDEN + A * HIDDEN + HIDDEN * HIDDEN   # weights
        + HIDDEN * OUT_PAD + 3 * HIDDEN               # fc3 + packed biases
        + B * OUT_PAD                                 # padded output
    )

    out_padded = pl.pallas_call(
        _critic_kernel,
        out_shape=jax.ShapeDtypeStruct((B, OUT_PAD), jnp.float32),
        grid=grid,
        in_specs=[
            pl.BlockSpec((tb, S), lambda i: (i, 0)),          # state tile
            pl.BlockSpec((tb, A), lambda i: (i, 0)),          # action tile
            pl.BlockSpec((S, HIDDEN), lambda i: (0, 0)),      # W1_state (resident)
            pl.BlockSpec((A, HIDDEN), lambda i: (0, 0)),      # W1_action (resident)
            pl.BlockSpec((HIDDEN, HIDDEN), lambda i: (0, 0)),  # W2 (resident)
            pl.BlockSpec((HIDDEN, OUT_PAD), lambda i: (0, 0)),  # W3 padded (resident)
            pl.BlockSpec((3, HIDDEN), lambda i: (0, 0)),      # packed biases (resident)
        ],
        out_specs=pl.BlockSpec((tb, OUT_PAD), lambda i: (i, 0)),
        compiler_params=pltpu.CompilerParams(
            dimension_semantics=("parallel",),
        ),
        cost_estimate=pl.CostEstimate(
            flops=flops, transcendentals=0, bytes_accessed=bytes_accessed
        ),
    )(state, action, w1s, w1a, w2, w3p, biases)

    # Lane-dense slab -> (B, 1) Q-value (column 0 is the real output).
    return out_padded[:, :1]


def init_critic_params(key, state_dim, action_dim):
    """Init mirroring nn.Linear defaults (uniform +/- 1/sqrt(fan_in)).

    Storage layout (kernel-friendly):
      w1s:    (state_dim, 256)   -- first-layer weight rows for `state`
      w1a:    (action_dim, 256)  -- first-layer weight rows for `action`
      w2:     (256, 256)
      w3p:    (256, 128)         -- fc3 weight in column 0, zero-padded lanes
      biases: (3, 256)           -- row0=b1, row1=b2, row2=[b3, 0, ..., 0]
    """
    in1 = state_dim + action_dim

    def _layer(k, fan_in, fan_out):
        kw, kb = jax.random.split(k)
        bound = 1.0 / jnp.sqrt(jnp.float32(fan_in))
        w = jax.random.uniform(kw, (fan_in, fan_out), jnp.float32, -bound, bound)
        b = jax.random.uniform(kb, (fan_out,), jnp.float32, -bound, bound)
        return w, b

    w1, b1 = _layer(jax.random.fold_in(key, 0), in1, HIDDEN)
    w2, b2 = _layer(jax.random.fold_in(key, 1), HIDDEN, HIDDEN)
    w3, b3 = _layer(jax.random.fold_in(key, 2), HIDDEN, 1)

    w1s = w1[:state_dim, :]
    w1a = w1[state_dim:, :]

    # Pad fc3 weight to 128 lanes (zeros in cols 1..127 -> padded outputs are b3-free junk we never read).
    w3p = jnp.zeros((HIDDEN, OUT_PAD), jnp.float32).at[:, :1].set(w3)

    b3_row = jnp.zeros((HIDDEN,), jnp.float32).at[0].set(b3[0])
    biases = jnp.stack([b1, b2, b3_row], axis=0)  # (3, 256)

    return (w1s, w1a, w2, w3p, biases)


def _reference_forward(state, action, params):
    """Pure-JAX reference matching the PyTorch module's math."""
    w1s, w1a, w2, w3p, biases = params
    x = jnp.concatenate([state, action], axis=1)
    w1 = jnp.concatenate([w1s, w1a], axis=0)
    h1 = jnp.maximum(x @ w1 + biases[0], 0.0)
    h2 = jnp.maximum(h1 @ w2 + biases[1], 0.0)
    return h2 @ w3p[:, :1] + biases[2, 0]


if __name__ == "__main__":
    key = jax.random.PRNGKey(0)
    k_state, k_action, k_params = jax.random.split(key, 3)

    batch, state_dim, action_dim = 2, 16, 4
    state = jax.random.normal(k_state, (batch, state_dim), jnp.float32)
    action = jax.random.normal(k_action, (batch, action_dim), jnp.float32)
    params = init_critic_params(k_params, state_dim, action_dim)

    q = critic_forward(state, action, params)
    q = jax.block_until_ready(q)

    q_ref = _reference_forward(state, action, params)
    assert q.shape == (batch, 1), q.shape
    assert jnp.allclose(q, q_ref, atol=1e-5, rtol=1e-5), (q, q_ref)

    print("KERNEL_OK")
</pallas_src>

<mosaic_0001>
module attributes {stable_mosaic.version = 11 : i64} {
  func.func @_critic_kernel(%arg0: i32, %arg1: memref<2x16xf32, #tpu.memory_space<vmem>>, %arg2: memref<2x4xf32, #tpu.memory_space<vmem>>, %arg3: memref<16x256xf32, #tpu.memory_space<vmem>>, %arg4: memref<4x256xf32, #tpu.memory_space<vmem>>, %arg5: memref<256x256xf32, #tpu.memory_space<vmem>>, %arg6: memref<256x128xf32, #tpu.memory_space<vmem>>, %arg7: memref<3x256xf32, #tpu.memory_space<vmem>>, %arg8: memref<2x128xf32, #tpu.memory_space<vmem>>) attributes {dimension_semantics = [#tpu.dimension_semantics<parallel>], iteration_bounds = array<i64: 1>, scalar_prefetch = 0 : i64, scratch_operands = 0 : i64, tpu.core_type = #tpu.core_type<tc>, window_params = [{transform_indices = @transform_0, window_bounds = array<i64: 2, 16>}, {transform_indices = @transform_1, window_bounds = array<i64: 2, 4>}, {pipeline_mode = #tpu.pipeline_mode<synchronous>, transform_indices = @transform_2, window_bounds = array<i64: 16, 256>}, {pipeline_mode = #tpu.pipeline_mode<synchronous>, transform_indices = @transform_3, window_bounds = array<i64: 4, 256>}, {pipeline_mode = #tpu.pipeline_mode<synchronous>, transform_indices = @transform_4, window_bounds = array<i64: 256, 256>}, {pipeline_mode = #tpu.pipeline_mode<synchronous>, transform_indices = @transform_5, window_bounds = array<i64: 256, 128>}, {pipeline_mode = #tpu.pipeline_mode<synchronous>, transform_indices = @transform_6, window_bounds = array<i64: 3, 256>}, {transform_indices = @transform_7, window_bounds = array<i64: 2, 128>}]} {
    %c0 = arith.constant 0 : index
    %c0_0 = arith.constant 0 : index
    %0 = vector.load %arg1[%c0, %c0_0] : memref<2x16xf32, #tpu.memory_space<vmem>>, vector<2x16xf32>
    %c0_1 = arith.constant 0 : index
    %c0_2 = arith.constant 0 : index
    %1 = vector.load %arg3[%c0_1, %c0_2] : memref<16x256xf32, #tpu.memory_space<vmem>>, vector<16x256xf32>
    %cst = arith.constant dense<0.000000e+00> : vector<2x256xf32>
    %2 = tpu.matmul %0, %1, %cst {dimension_numbers = #tpu.dot_dimension_numbers<[1], [0], [0], [1], [0, 0, 1, 1], [], []>} : vector<2x16xf32>, vector<16x256xf32>, vector<2x256xf32> -> vector<2x256xf32>
    %c0_3 = arith.constant 0 : index
    %c0_4 = arith.constant 0 : index
    %3 = vector.load %arg2[%c0_3, %c0_4] : memref<2x4xf32, #tpu.memory_space<vmem>>, vector<2x4xf32>
    %c0_5 = arith.constant 0 : index
    %c0_6 = arith.constant 0 : index
    %4 = vector.load %arg4[%c0_5, %c0_6] : memref<4x256xf32, #tpu.memory_space<vmem>>, vector<4x256xf32>
    %cst_7 = arith.constant dense<0.000000e+00> : vector<2x256xf32>
    %5 = tpu.matmul %3, %4, %cst_7 {dimension_numbers = #tpu.dot_dimension_numbers<[1], [0], [0], [1], [0, 0, 1, 1], [], []>} : vector<2x4xf32>, vector<4x256xf32>, vector<2x256xf32> -> vector<2x256xf32>
    %6 = arith.addf %2, %5 : vector<2x256xf32>
    %c0_8 = arith.constant 0 : index
    %c0_9 = arith.constant 0 : index
    %7 = vector.load %arg7[%c0_8, %c0_9] : memref<3x256xf32, #tpu.memory_space<vmem>>, vector<1x256xf32>
    %8 = vector.broadcast %7 : vector<1x256xf32> to vector<2x256xf32>
    %9 = arith.addf %6, %8 : vector<2x256xf32>
    %cst_10 = arith.constant 0.000000e+00 : f32
    %10 = vector.broadcast %cst_10 : f32 to vector<2x256xf32>
    %11 = arith.maximumf %9, %10 : vector<2x256xf32>
    %c0_11 = arith.constant 0 : index
    %c0_12 = arith.constant 0 : index
    %12 = vector.load %arg5[%c0_11, %c0_12] : memref<256x256xf32, #tpu.memory_space<vmem>>, vector<256x256xf32>
    %cst_13 = arith.constant dense<0.000000e+00> : vector<2x256xf32>
    %13 = tpu.matmul %11, %12, %cst_13 {dimension_numbers = #tpu.dot_dimension_numbers<[1], [0], [0], [1], [0, 0, 1, 1], [], []>} : vector<2x256xf32>, vector<256x256xf32>, vector<2x256xf32> -> vector<2x256xf32>
    %c1 = arith.constant 1 : index
    %c0_14 = arith.constant 0 : index
    %14 = vector.load %arg7[%c1, %c0_14] : memref<3x256xf32, #tpu.memory_space<vmem>>, vector<1x256xf32>
    %15 = vector.broadcast %14 : vector<1x256xf32> to vector<2x256xf32>
    %16 = arith.addf %13, %15 : vector<2x256xf32>
    %cst_15 = arith.constant 0.000000e+00 : f32
    %17 = vector.broadcast %cst_15 : f32 to vector<2x256xf32>
    %18 = arith.maximumf %16, %17 : vector<2x256xf32>
    %c0_16 = arith.constant 0 : index
    %c0_17 = arith.constant 0 : index
    %19 = vector.load %arg6[%c0_16, %c0_17] : memref<256x128xf32, #tpu.memory_space<vmem>>, vector<256x128xf32>
    %cst_18 = arith.constant dense<0.000000e+00> : vector<2x128xf32>
    %20 = tpu.matmul %18, %19, %cst_18 {dimension_numbers = #tpu.dot_dimension_numbers<[1], [0], [0], [1], [0, 0, 1, 1], [], []>} : vector<2x256xf32>, vector<256x128xf32>, vector<2x128xf32> -> vector<2x128xf32>
    %c2 = arith.constant 2 : index
    %c0_19 = arith.constant 0 : index
    %21 = vector.load %arg7[%c2, %c0_19] : memref<3x256xf32, #tpu.memory_space<vmem>>, vector<1x128xf32>
    %22 = vector.broadcast %21 : vector<1x128xf32> to vector<2x128xf32>
    %23 = arith.addf %20, %22 : vector<2x128xf32>
    %c0_20 = arith.constant 0 : index
    %c0_21 = arith.constant 0 : index
    %24 = vector.load %arg8[%c0_20, %c0_21] : memref<2x128xf32, #tpu.memory_space<vmem>>, vector<2x128xf32>
    tpu.vector_store %arg8[%c0_20, %c0_21], %23 {strides = array<i32>} : memref<2x128xf32, #tpu.memory_space<vmem>>, vector<2x128xf32>,
    return
  }
  func.func @transform_0(%arg0: i32) -> (i32, i32) {
    %c0_i32 = arith.constant 0 : i32
    %c0_i32_0 = arith.constant 0 : i32
    return %arg0, %c0_i32 : i32, i32
  }
  func.func @transform_1(%arg0: i32) -> (i32, i32) {
    %c0_i32 = arith.constant 0 : i32
    %c0_i32_0 = arith.constant 0 : i32
    return %arg0, %c0_i32 : i32, i32
  }
  func.func @transform_2(%arg0: i32) -> (i32, i32) {
    %c0_i32 = arith.constant 0 : i32
    %c0_i32_0 = arith.constant 0 : i32
    %c0_i32_1 = arith.constant 0 : i32
    return %c0_i32, %c0_i32_0 : i32, i32
  }
  func.func @transform_3(%arg0: i32) -> (i32, i32) {
    %c0_i32 = arith.constant 0 : i32
    %c0_i32_0 = arith.constant 0 : i32
    %c0_i32_1 = arith.constant 0 : i32
    return %c0_i32, %c0_i32_0 : i32, i32
  }
  func.func @transform_4(%arg0: i32) -> (i32, i32) {
    %c0_i32 = arith.constant 0 : i32
    %c0_i32_0 = arith.constant 0 : i32
    %c0_i32_1 = arith.constant 0 : i32
    return %c0_i32, %c0_i32_0 : i32, i32
  }
  func.func @transform_5(%arg0: i32) -> (i32, i32) {
    %c0_i32 = arith.constant 0 : i32
    %c0_i32_0 = arith.constant 0 : i32
    %c0_i32_1 = arith.constant 0 : i32
    return %c0_i32, %c0_i32_0 : i32, i32
  }
  func.func @transform_6(%arg0: i32) -> (i32, i32) {
    %c0_i32 = arith.constant 0 : i32
    %c0_i32_0 = arith.constant 0 : i32
    %c0_i32_1 = arith.constant 0 : i32
    return %c0_i32, %c0_i32_0 : i32, i32
  }
  func.func @transform_7(%arg0: i32) -> (i32, i32) {
    %c0_i32 = arith.constant 0 : i32
    %c0_i32_0 = arith.constant 0 : i32
    return %arg0, %c0_i32 : i32, i32
  }
}

</mosaic_0001>

<llo_original>
// kernel: critic_forward.1
$region0: #{critic_forward.1}
  #allocation0 [shape = 'u32[]', space=smem, size = 0x4, offset = 0x4, fixed_abs, tag = 'smem constant byte address 0x4 - core index']
  #allocation1 [shape = 'u32[144,128]{1,0:T(1,128)}', space=vmem, size = 0x12000, scoped, tag = 'internal scratch']
  %s0 = inlined_call_operand.hbm [shape: f32[2,16], index: 0, kind: input, shape index: {}]
  %s1 = inlined_call_operand.vmem [shape: f32[2,4], index: 1, kind: input, shape index: {}]
  %s2 = inlined_call_operand.hbm [shape: f32[16,256], index: 2, kind: input, shape index: {}]
  %s3 = inlined_call_operand.vmem [shape: f32[4,256], index: 3, kind: input, shape index: {}]
  %s4 = inlined_call_operand.hbm [shape: f32[256,256], index: 4, kind: input, shape index: {}]
  %s5 = inlined_call_operand.hbm [shape: f32[256,128], index: 5, kind: input, shape index: {}]
  %s6 = inlined_call_operand.vmem [shape: f32[3,256], index: 6, kind: input, shape index: {}]
  %s7 = inlined_call_operand.vmem [shape: f32[2,128], index: 7, kind: output, shape index: {}]
  %s8 = sld [smem:[#allocation0]]
  $region54: #{critic_forward.1} parent=0
    _
  %s10 = ssub.s32 1, %s8
  %s11 = scalar_select 0, %s10, %s8
  $region1: #{critic_forward.1} parent=0
    #allocation2 [shape = 'u8[1024]{0}', space=vmem, size = 0x400, scoped, tag = 'input window, operand 0, single buffered']
    #allocation3 [shape = 's32[1]{0}', space=sflag, size = 0x4, scoped, tag = 'scoped memory for critic_forward.1']
    #allocation4 [shape = 'u8[16384]{0}', space=vmem, size = 0x4000, scoped, tag = 'input window, operand 2, single buffered']
    #allocation5 [shape = 's32[1]{0}', space=sflag, size = 0x4, scoped, tag = 'scoped memory for critic_forward.1']
    #allocation6 [shape = 'u8[262144]{0}', space=vmem, size = 0x40000, scoped, tag = 'input window, operand 4, single buffered']
    #allocation7 [shape = 'u8[131072]{0}', space=vmem, size = 0x20000, scoped, tag = 'input window, operand 5, single buffered']
    #allocation8 [shape = 's32[1]{0}', space=sflag, size = 0x4, scoped, tag = 'scoped memory for critic_forward.1']
    %12 = vsyncpa [#allocation3], 0
    %13 = vsyncpa [#allocation5], 0
    %14 = vsyncpa [#allocation8], 0
    // Predicated region
    $region2: #{critic_forward.1} parent=1 // pred_check
      _
    $region3: #{critic_forward.1} parent=1 // pred_check_branch
      %16 = sbr.rel (0) target = $region5
    $region4: #{critic_forward.1} parent=1 // pred_region
      %s18 = ssub.s32 32, 32
      %19 = vsyncadd [#allocation3], %s18
      %s21 = sshll.u32 [#allocation2], 4
      %s22 = int_to_ptr.vmem [resolvable:$true] %s21
      %24 = dma.hbm_to_vmem [thread:$0]  %s0, 32, %s22, [#allocation3]
    $region5: #{critic_forward.1} parent=1 // pred_fallthru
      _
    // Predicated region
    $region6: #{critic_forward.1} parent=1 // pred_check
      _
    $region7: #{critic_forward.1} parent=1 // pred_check_branch
      %26 = sbr.rel (0) target = $region9
    $region8: #{critic_forward.1} parent=1 // pred_region
      _
    $region9: #{critic_forward.1} parent=1 // pred_fallthru
      _
    // Predicated region
    $region10: #{critic_forward.1} parent=1 // pred_check
      _
    $region11: #{critic_forward.1} parent=1 // pred_check_branch
      %28 = sbr.rel (0) target = $region13
    $region12: #{critic_forward.1} parent=1 // pred_region
      %s30 = ssub.s32 512, 512
      %31 = vsyncadd [#allocation5], %s30
      %s32 = sshll.u32 [#allocation4], 4
      %s33 = int_to_ptr.vmem [resolvable:$true] %s32
      %38 = dma.hbm_to_vmem [thread:$0]  %s2, 512, %s33, [#allocation5], 256, 256, 16
    $region13: #{critic_forward.1} parent=1 // pred_fallthru
      _
    // Predicated region
    $region14: #{critic_forward.1} parent=1 // pred_check
      _
    $region15: #{critic_forward.1} parent=1 // pred_check_branch
      %40 = sbr.rel (0) target = $region17
    $region16: #{critic_forward.1} parent=1 // pred_region
      _
    $region17: #{critic_forward.1} parent=1 // pred_fallthru
      _
    // Predicated region
    $region18: #{critic_forward.1} parent=1 // pred_check
      _
    $region19: #{critic_forward.1} parent=1 // pred_check_branch
      %42 = sbr.rel (0) target = $region21
    $region20: #{critic_forward.1} parent=1 // pred_region
      %s44 = ssub.s32 8192, 8192
      %45 = vsyncadd [#allocation5], %s44
      %s46 = sshll.u32 [#allocation6], 4
      %s47 = int_to_ptr.vmem [resolvable:$true] %s46
      %52 = dma.hbm_to_vmem [thread:$0]  %s4, 8192, %s47, [#allocation5], 256, 256, 16
    $region21: #{critic_forward.1} parent=1 // pred_fallthru
      _
    // Predicated region
    $region22: #{critic_forward.1} parent=1 // pred_check
      _
    $region23: #{critic_forward.1} parent=1 // pred_check_branch
      %54 = sbr.rel (0) target = $region25
    $region24: #{critic_forward.1} parent=1 // pred_region
      %s56 = ssub.s32 4096, 4096
      %57 = vsyncadd [#allocation8], %s56
      %s58 = sshll.u32 [#allocation7], 4
      %s59 = int_to_ptr.vmem [resolvable:$true] %s58
      %64 = dma.hbm_to_vmem [thread:$0]  %s5, 4096, %s59, [#allocation8], 128, 128, 8
    $region25: #{critic_forward.1} parent=1 // pred_fallthru
      _
    // Predicated region
    $region26: #{critic_forward.1} parent=1 // pred_check
      _
    $region27: #{critic_forward.1} parent=1 // pred_check_branch
      %66 = sbr.rel (0) target = $region29
    $region28: #{critic_forward.1} parent=1 // pred_region
      _
    $region29: #{critic_forward.1} parent=1 // pred_fallthru
      _
    // Predicated region
    $region30: #{critic_forward.1} parent=1 // pred_check
      _
    $region31: #{critic_forward.1} parent=1 // pred_check_branch
      %68 = sbr.rel (0) target = $region33
    $region32: #{critic_forward.1} parent=1 // pred_region
      %69 = dma.done [#allocation3], 32
    $region33: #{critic_forward.1} parent=1 // pred_fallthru
      _
    // Predicated region
    $region34: #{critic_forward.1} parent=1 // pred_check
      _
    $region35: #{critic_forward.1} parent=1 // pred_check_branch
      %71 = sbr.rel (0) target = $region37
    $region36: #{critic_forward.1} parent=1 // pred_region
      %72 = dma.done [#allocation5], 512
    $region37: #{critic_forward.1} parent=1 // pred_fallthru
      _
    // Predicated region
    $region38: #{critic_forward.1} parent=1 // pred_check
      _
    $region39: #{critic_forward.1} parent=1 // pred_check_branch
      %74 = sbr.rel (0) target = $region41
    $region40: #{critic_forward.1} parent=1 // pred_region
      %75 = dma.done [#allocation5], 8192
    $region41: #{critic_forward.1} parent=1 // pred_fallthru
      _
    // Predicated region
    $region42: #{critic_forward.1} parent=1 // pred_check
      _
    $region43: #{critic_forward.1} parent=1 // pred_check_branch
      %77 = sbr.rel (0) target = $region45
    $region44: #{critic_forward.1} parent=1 // pred_region
      %78 = dma.done [#allocation8], 4096
    $region45: #{critic_forward.1} parent=1 // pred_fallthru
      _
    %v79 = vld [vmem:[#allocation2] sm:$0x3]
    %v80 = vld [vmem:[#allocation4] sm:$0xff]
    %v81 = vld [vmem:[#allocation4 + $0x8] sm:$0xff]
    %v82 = vld [vmem:[#allocation4 + $0x10] sm:$0xff]
    %v83 = vld [vmem:[#allocation4 + $0x18] sm:$0xff]
    %v84 = vld [vmem:[%s1] sm:$0x3]
    %v85 = vld [vmem:[%s3] sm:$0xff]
    %v87 = vcombine.high %v85, %v85
    %vm88 = vcmask 31744
    %v90 = vsel %vm88, %v84, 0
    %vm92 = vcmask 1043456
    %v93 = vsel %vm92, %v85, 0
    %v95 = vsel %vm92, %v87, 0
    %97 = vmatprep.subr.mxu0 %v95
    %98 = vmatpush1.msra.mxu0 %v93
    %99 = vmatprep.subr.mxu0 0.0
    %100 = vmatpush1.msra.mxu0 0.0
    %101 = vmatprep.subr.mxu0 0.0
    %102 = vmatpush1.msra.mxu0 0.0
    %103 = vmatprep.subr.mxu0 0.0
    %104 = vmatpush1.msra.mxu0 0.0
    %105 = vmatprep.subr.mxu0 0.0
    %106 = vmatpush1.msra.mxu0 0.0
    %107 = vmatprep.subr.mxu0 0.0
    %108 = vmatpush1.msra.mxu0 0.0
    %109 = vmatprep.subr.mxu0 0.0
    %110 = vmatpush1.msra.mxu0 0.0
    %111 = vmatprep.subr.mxu0 0.0
    %112 = vmatpush1.msra.mxu0 0.0
    %113 = vmatprep.subr.mxu0 0.0
    %114 = vmatpush1.msra.mxu0 0.0
    %115 = vmatprep.subr.mxu0 0.0
    %116 = vmatpush1.msra.mxu0 0.0
    %117 = vmatprep.subr.mxu0 0.0
    %118 = vmatpush1.msra.mxu0 0.0
    %119 = vmatprep.subr.mxu0 0.0
    %120 = vmatpush1.msra.mxu0 0.0
    %121 = vmatprep.subr.mxu0 0.0
    %122 = vmatpush1.msra.mxu0 0.0
    %123 = vmatprep.subr.mxu0 0.0
    %124 = vmatpush1.msra.mxu0 0.0
    %125 = vmatprep.subr.mxu0 0.0
    %126 = vmatpush1.msra.mxu0 0.0
    %127 = vmatprep.subr.mxu0 0.0
    %128 = vmatpush1.msra.mxu0 0.0
    %129 = vmatprep.subr.mxu0 0.0
    %130 = vmatpush1.msra.mxu0 0.0
    %131 = vmatprep.subr.mxu0 0.0
    %132 = vmatpush1.msra.mxu0 0.0
    %133 = vmatprep.subr.mxu0 0.0
    %134 = vmatpush1.msra.mxu0 0.0
    %135 = vmatprep.subr.mxu0 0.0
    %136 = vmatpush1.msra.mxu0 0.0
    %137 = vmatprep.subr.mxu0 0.0
    %138 = vmatpush1.msra.mxu0 0.0
    %139 = vmatprep.subr.mxu0 0.0
    %140 = vmatpush1.msra.mxu0 0.0
    %141 = vmatprep.subr.mxu0 0.0
    %142 = vmatpush1.msra.mxu0 0.0
    %143 = vmatprep.subr.mxu0 0.0
    %144 = vmatpush1.msra.mxu0 0.0
    %145 = vmatprep.subr.mxu0 0.0
    %146 = vmatpush1.msra.mxu0 0.0
    %147 = vmatprep.subr.mxu0 0.0
    %148 = vmatpush1.msra.mxu0 0.0
    %149 = vmatprep.subr.mxu0 0.0
    %150 = vmatpush1.msra.mxu0 0.0
    %151 = vmatprep.subr.mxu0 0.0
    %152 = vmatpush1.msra.mxu0 0.0
    %153 = vmatprep.subr.mxu0 0.0
    %154 = vmatpush1.msra.mxu0 0.0
    %155 = vmatprep.subr.mxu0 0.0
    %156 = vmatpush1.msra.mxu0 0.0
    %157 = vmatprep.subr.mxu0 0.0
    %158 = vmatpush1.msra.mxu0 0.0
    %159 = vmatprep.subr.mxu0 0.0
    %160 = vmatpush1.msra.mxu0 0.0
    %161 = vmatprep.mubr.f32.mxu0 0.0
    %162 = vmatmul.mubr.f32.gmra.mrb[0].mxu0 %v90
    %v163 = vpop.f32.mrb[0].mxu0
    %v164 = vadd.f32 0.0, %v163
    %v165 = vpop.f32.mrb[0].mxu0
    %v166 = vadd.f32 0.0, %v165
    %167 = vdwg.mxu0
    %vm168 = vcmask 130048
    %v170 = vsel %vm168, %v79, 0
    %172 = vmatprep.subr.mxu0 %v81
    %173 = vmatpush1.msra.mxu0 %v80
    %174 = vmatprep.subr.mxu0 %v83
    %175 = vmatpush1.msra.mxu0 %v82
    %176 = vmatprep.subr.mxu0 0.0
    %177 = vmatpush1.msra.mxu0 0.0
    %178 = vmatprep.subr.mxu0 0.0
    %179 = vmatpush1.msra.mxu0 0.0
    %180 = vmatprep.subr.mxu0 0.0
    %181 = vmatpush1.msra.mxu0 0.0
    %182 = vmatprep.subr.mxu0 0.0
    %183 = vmatpush1.msra.mxu0 0.0
    %184 = vmatprep.subr.mxu0 0.0
    %185 = vmatpush1.msra.mxu0 0.0
    %186 = vmatprep.subr.mxu0 0.0
    %187 = vmatpush1.msra.mxu0 0.0
    %188 = vmatprep.subr.mxu0 0.0
    %189 = vmatpush1.msra.mxu0 0.0
    %190 = vmatprep.subr.mxu0 0.0
    %191 = vmatpush1.msra.mxu0 0.0
    %192 = vmatprep.subr.mxu0 0.0
    %193 = vmatpush1.msra.mxu0 0.0
    %194 = vmatprep.subr.mxu0 0.0
    %195 = vmatpush1.msra.mxu0 0.0
    %196 = vmatprep.subr.mxu0 0.0
    %197 = vmatpush1.msra.mxu0 0.0
    %198 = vmatprep.subr.mxu0 0.0
    %199 = vmatpush1.msra.mxu0 0.0
    %200 = vmatprep.subr.mxu0 0.0
    %201 = vmatpush1.msra.mxu0 0.0
    %202 = vmatprep.subr.mxu0 0.0
    %203 = vmatpush1.msra.mxu0 0.0
    %204 = vmatprep.subr.mxu0 0.0
    %205 = vmatpush1.msra.mxu0 0.0
    %206 = vmatprep.subr.mxu0 0.0
    %207 = vmatpush1.msra.mxu0 0.0
    %208 = vmatprep.subr.mxu0 0.0
    %209 = vmatpush1.msra.mxu0 0.0
    %210 = vmatprep.subr.mxu0 0.0
    %211 = vmatpush1.msra.mxu0 0.0
    %212 = vmatprep.subr.mxu0 0.0
    %213 = vmatpush1.msra.mxu0 0.0
    %214 = vmatprep.subr.mxu0 0.0
    %215 = vmatpush1.msra.mxu0 0.0
    %216 = vmatprep.subr.mxu0 0.0
    %217 = vmatpush1.msra.mxu0 0.0
    %218 = vmatprep.subr.mxu0 0.0
    %219 = vmatpush1.msra.mxu0 0.0
    %220 = vmatprep.subr.mxu0 0.0
    %221 = vmatpush1.msra.mxu0 0.0
    %222 = vmatprep.subr.mxu0 0.0
    %223 = vmatpush1.msra.mxu0 0.0
    %224 = vmatprep.subr.mxu0 0.0
    %225 = vmatpush1.msra.mxu0 0.0
    %226 = vmatprep.subr.mxu0 0.0
    %227 = vmatpush1.msra.mxu0 0.0
    %228 = vmatprep.subr.mxu0 0.0
    %229 = vmatpush1.msra.mxu0 0.0
    %230 = vmatprep.subr.mxu0 0.0
    %231 = vmatpush1.msra.mxu0 0.0
    %232 = vmatprep.subr.mxu0 0.0
    %233 = vmatpush1.msra.mxu0 0.0
    %234 = vmatprep.subr.mxu0 0.0
    %235 = vmatpush1.msra.mxu0 0.0
    %236 = vmatprep.mubr.f32.mxu0 0.0
    %237 = vmatmul.mubr.f32.gmra.mrb[0].mxu0 %v170
    %v238 = vpop.f32.mrb[0].mxu0
    %v239 = vadd.f32 %v164, %v238
    %v240 = vpop.f32.mrb[0].mxu0
    %v241 = vadd.f32 %v166, %v240
    %242 = vdwg.mxu0
    %v243 = vld [vmem:[%s6] ss:$4 sm:$0x3]
    %v245 = vlaneseq
    %v246 = vshrl.u32 %v245, 7
    %v247 = vsub.s32 0, %v246
    %v248 = vrot.slane %v243, %v247
    %v249 = vlaneseq
    %v250 = vshrl.u32 %v249, 7
    %v251 = vsub.s32 1, %v250
    %v252 = vrot.slane %v243, %v251
    %v255 = vadd.f32 %v239, %v248
    %v256 = vadd.f32 %v241, %v252
    %v257 = vmax.f32 %v255, 0.0
    %v258 = vmax.f32 %v256, 0.0
    %v259 = vld [vmem:[#allocation6] sm:$0xff]
    %v260 = vld [vmem:[#allocation6 + $0x8] sm:$0xff]
    %v261 = vld [vmem:[#allocation6 + $0x10] sm:$0xff]
    %v262 = vld [vmem:[#allocation6 + $0x18] sm:$0xff]
    %v263 = vld [vmem:[#allocation6 + $0x20] sm:$0xff]
    %v264 = vld [vmem:[#allocation6 + $0x28] sm:$0xff]
    %v265 = vld [vmem:[#allocation6 + $0x30] sm:$0xff]
    %v266 = vld [vmem:[#allocation6 + $0x38] sm:$0xff]
    %v267 = vld [vmem:[#allocation6 + $0x40] sm:$0xff]
    %v268 = vld [vmem:[#allocation6 + $0x48] sm:$0xff]
    %v269 = vld [vmem:[#allocation6 + $0x50] sm:$0xff]
    %v270 = vld [vmem:[#allocation6 + $0x58] sm:$0xff]
    %v271 = vld [vmem:[#allocation6 + $0x60] sm:$0xff]
    %v272 = vld [vmem:[#allocation6 + $0x68] sm:$0xff]
    %v273 = vld [vmem:[#allocation6 + $0x70] sm:$0xff]
    %v274 = vld [vmem:[#allocation6 + $0x78] sm:$0xff]
    %v275 = vld [vmem:[#allocation6 + $0x80] sm:$0xff]
    %v276 = vld [vmem:[#allocation6 + $0x88] sm:$0xff]
    %v277 = vld [vmem:[#allocation6 + $0x90] sm:$0xff]
    %v278 = vld [vmem:[#allocation6 + $0x98] sm:$0xff]
    %v279 = vld [vmem:[#allocation6 + $0xa0] sm:$0xff]
    %v280 = vld [vmem:[#allocation6 + $0xa8] sm:$0xff]
    %v281 = vld [vmem:[#allocation6 + $0xb0] sm:$0xff]
    %v282 = vld [vmem:[#allocation6 + $0xb8] sm:$0xff]
    %v283 = vld [vmem:[#allocation6 + $0xc0] sm:$0xff]
    %v284 = vld [vmem:[#allocation6 + $0xc8] sm:$0xff]
    %v285 = vld [vmem:[#allocation6 + $0xd0] sm:$0xff]
    %v286 = vld [vmem:[#allocation6 + $0xd8] sm:$0xff]
    %v287 = vld [vmem:[#allocation6 + $0xe0] sm:$0xff]
    %v288 = vld [vmem:[#allocation6 + $0xe8] sm:$0xff]
    %v289 = vld [vmem:[#allocation6 + $0xf0] sm:$0xff]
    %v290 = vld [vmem:[#allocation6 + $0xf8] sm:$0xff]
    %v291 = vld [vmem:[#allocation6 + $0x100] sm:$0xff]
    %v292 = vld [vmem:[#allocation6 + $0x108] sm:$0xff]
    %v293 = vld [vmem:[#allocation6 + $0x110] sm:$0xff]
    %v294 = vld [vmem:[#allocation6 + $0x118] sm:$0xff]
    %v295 = vld [vmem:[#allocation6 + $0x120] sm:$0xff]
    %v296 = vld [vmem:[#allocation6 + $0x128] sm:$0xff]
    %v297 = vld [vmem:[#allocation6 + $0x130] sm:$0xff]
    %v298 = vld [vmem:[#allocation6 + $0x138] sm:$0xff]
    %v299 = vld [vmem:[#allocation6 + $0x140] sm:$0xff]
    %v300 = vld [vmem:[#allocation6 + $0x148] sm:$0xff]
    %v301 = vld [vmem:[#allocation6 + $0x150] sm:$0xff]
    %v302 = vld [vmem:[#allocation6 + $0x158] sm:$0xff]
    %v303 = vld [vmem:[#allocation6 + $0x160] sm:$0xff]
    %v304 = vld [vmem:[#allocation6 + $0x168] sm:$0xff]
    %v305 = vld [vmem:[#allocation6 + $0x170] sm:$0xff]
    %v306 = vld [vmem:[#allocation6 + $0x178] sm:$0xff]
    %v307 = vld [vmem:[#allocation6 + $0x180] sm:$0xff]
    %v308 = vld [vmem:[#allocation6 + $0x188] sm:$0xff]
    %v309 = vld [vmem:[#allocation6 + $0x190] sm:$0xff]
    %v310 = vld [vmem:[#allocation6 + $0x198] sm:$0xff]
    %v311 = vld [vmem:[#allocation6 + $0x1a0] sm:$0xff]
    %v312 = vld [vmem:[#allocation6 + $0x1a8] sm:$0xff]
    %v313 = vld [vmem:[#allocation6 + $0x1b0] sm:$0xff]
    %v314 = vld [vmem:[#allocation6 + $0x1b8] sm:$0xff]
    %v315 = vld [vmem:[#allocation6 + $0x1c0] sm:$0xff]
    %v316 = vld [vmem:[#allocation6 + $0x1c8] sm:$0xff]
    %v317 = vld [vmem:[#allocation6 + $0x1d0] sm:$0xff]
    %v318 = vld [vmem:[#allocation6 + $0x1d8] sm:$0xff]
    %v319 = vld [vmem:[#allocation6 + $0x1e0] sm:$0xff]
    %v320 = vld [vmem:[#allocation6 + $0x1e8] sm:$0xff]
    %v321 = vld [vmem:[#allocation6 + $0x1f0] sm:$0xff]
    %v322 = vld [vmem:[#allocation6 + $0x1f8] sm:$0xff]
    %s323 = scalar_lea.vmem %s6, 1
    %v324 = vld [vmem:[%s323] ss:$4 sm:$0x3]
    %v326 = vlaneseq
    %v327 = vshrl.u32 %v326, 7
    %v328 = vsub.s32 0, %v327
    %v329 = vrot.slane %v324, %v328
    %v330 = vlaneseq
    %v331 = vshrl.u32 %v330, 7
    %v332 = vsub.s32 1, %v331
    %v333 = vrot.slane %v324, %v332
    %336 = vmatprep.subr.mxu0 %v260
    %337 = vmatpush1.msra.mxu0 %v259
    %338 = vmatprep.subr.mxu0 %v262
    %339 = vmatpush1.msra.mxu0 %v261
    %340 = vmatprep.subr.mxu0 %v264
    %341 = vmatpush1.msra.mxu0 %v263
    %342 = vmatprep.subr.mxu0 %v266
    %343 = vmatpush1.msra.mxu0 %v265
    %344 = vmatprep.subr.mxu0 %v268
    %345 = vmatpush1.msra.mxu0 %v267
    %346 = vmatprep.subr.mxu0 %v270
    %347 = vmatpush1.msra.mxu0 %v269
    %348 = vmatprep.subr.mxu0 %v272
    %349 = vmatpush1.msra.mxu0 %v271
    %350 = vmatprep.subr.mxu0 %v274
    %351 = vmatpush1.msra.mxu0 %v273
    %352 = vmatprep.subr.mxu0 %v276
    %353 = vmatpush1.msra.mxu0 %v275
    %354 = vmatprep.subr.mxu0 %v278
    %355 = vmatpush1.msra.mxu0 %v277
    %356 = vmatprep.subr.mxu0 %v280
    %357 = vmatpush1.msra.mxu0 %v279
    %358 = vmatprep.subr.mxu0 %v282
    %359 = vmatpush1.msra.mxu0 %v281
    %360 = vmatprep.subr.mxu0 %v284
    %361 = vmatpush1.msra.mxu0 %v283
    %362 = vmatprep.subr.mxu0 %v286
    %363 = vmatpush1.msra.mxu0 %v285
    %364 = vmatprep.subr.mxu0 %v288
    %365 = vmatpush1.msra.mxu0 %v287
    %366 = vmatprep.subr.mxu0 %v290
    %367 = vmatpush1.msra.mxu0 %v289
    %368 = vmatprep.subr.mxu0 %v292
    %369 = vmatpush1.msra.mxu0 %v291
    %370 = vmatprep.subr.mxu0 %v294
    %371 = vmatpush1.msra.mxu0 %v293
    %372 = vmatprep.subr.mxu0 %v296
    %373 = vmatpush1.msra.mxu0 %v295
    %374 = vmatprep.subr.mxu0 %v298
    %375 = vmatpush1.msra.mxu0 %v297
    %376 = vmatprep.subr.mxu0 %v300
    %377 = vmatpush1.msra.mxu0 %v299
    %378 = vmatprep.subr.mxu0 %v302
    %379 = vmatpush1.msra.mxu0 %v301
    %380 = vmatprep.subr.mxu0 %v304
    %381 = vmatpush1.msra.mxu0 %v303
    %382 = vmatprep.subr.mxu0 %v306
    %383 = vmatpush1.msra.mxu0 %v305
    %384 = vmatprep.subr.mxu0 %v308
    %385 = vmatpush1.msra.mxu0 %v307
    %386 = vmatprep.subr.mxu0 %v310
    %387 = vmatpush1.msra.mxu0 %v309
    %388 = vmatprep.subr.mxu0 %v312
    %389 = vmatpush1.msra.mxu0 %v311
    %390 = vmatprep.subr.mxu0 %v314
    %391 = vmatpush1.msra.mxu0 %v313
    %392 = vmatprep.subr.mxu0 %v316
    %393 = vmatpush1.msra.mxu0 %v315
    %394 = vmatprep.subr.mxu0 %v318
    %395 = vmatpush1.msra.mxu0 %v317
    %396 = vmatprep.subr.mxu0 %v320
    %397 = vmatpush1.msra.mxu0 %v319
    %398 = vmatprep.subr.mxu0 %v322
    %399 = vmatpush1.msra.mxu0 %v321
    %400 = vmatprep.mubr.f32.mxu0 %v258
    %401 = vmatmul.mubr.f32.gmra.mrb[0].mxu0 %v257
    %v402 = vpop.f32.mrb[0].mxu0
    %v403 = vadd.f32 %v329, %v402
    %v404 = vpop.f32.mrb[0].mxu0
    %v405 = vadd.f32 %v333, %v404
    %406 = vdwg.mxu0
    %v407 = vmax.f32 %v403, 0.0
    %v408 = vmax.f32 %v405, 0.0
    %v409 = vld [vmem:[#allocation7] sm:$0xff]
    %v410 = vld [vmem:[#allocation7 + $0x8] sm:$0xff]
    %v411 = vld [vmem:[#allocation7 + $0x10] sm:$0xff]
    %v412 = vld [vmem:[#allocation7 + $0x18] sm:$0xff]
    %v413 = vld [vmem:[#allocation7 + $0x20] sm:$0xff]
    %v414 = vld [vmem:[#allocation7 + $0x28] sm:$0xff]
    %v415 = vld [vmem:[#allocation7 + $0x30] sm:$0xff]
    %v416 = vld [vmem:[#allocation7 + $0x38] sm:$0xff]
    %v417 = vld [vmem:[#allocation7 + $0x40] sm:$0xff]
    %v418 = vld [vmem:[#allocation7 + $0x48] sm:$0xff]
    %v419 = vld [vmem:[#allocation7 + $0x50] sm:$0xff]
    %v420 = vld [vmem:[#allocation7 + $0x58] sm:$0xff]
    %v421 = vld [vmem:[#allocation7 + $0x60] sm:$0xff]
    %v422 = vld [vmem:[#allocation7 + $0x68] sm:$0xff]
    %v423 = vld [vmem:[#allocation7 + $0x70] sm:$0xff]
    %v424 = vld [vmem:[#allocation7 + $0x78] sm:$0xff]
    %v425 = vld [vmem:[#allocation7 + $0x80] sm:$0xff]
    %v426 = vld [vmem:[#allocation7 + $0x88] sm:$0xff]
    %v427 = vld [vmem:[#allocation7 + $0x90] sm:$0xff]
    %v428 = vld [vmem:[#allocation7 + $0x98] sm:$0xff]
    %v429 = vld [vmem:[#allocation7 + $0xa0] sm:$0xff]
    %v430 = vld [vmem:[#allocation7 + $0xa8] sm:$0xff]
    %v431 = vld [vmem:[#allocation7 + $0xb0] sm:$0xff]
    %v432 = vld [vmem:[#allocation7 + $0xb8] sm:$0xff]
    %v433 = vld [vmem:[#allocation7 + $0xc0] sm:$0xff]
    %v434 = vld [vmem:[#allocation7 + $0xc8] sm:$0xff]
    %v435 = vld [vmem:[#allocation7 + $0xd0] sm:$0xff]
    %v436 = vld [vmem:[#allocation7 + $0xd8] sm:$0xff]
    %v437 = vld [vmem:[#allocation7 + $0xe0] sm:$0xff]
    %v438 = vld [vmem:[#allocation7 + $0xe8] sm:$0xff]
    %v439 = vld [vmem:[#allocation7 + $0xf0] sm:$0xff]
    %v440 = vld [vmem:[#allocation7 + $0xf8] sm:$0xff]
    %v441 = vld [vmem:[%s6 + $0x2] sm:$0x1]
    %v442 = vlaneseq
    %v443 = vshrl.u32 %v442, 7
    %v444 = vsub.s32 0, %v443
    %v445 = vrot.slane %v441, %v444
    %446 = vmatprep.subr.mxu0 0.0
    %447 = vmatpush1.msra.mxu0 %v409
    %448 = vmatprep.subr.mxu0 0.0
    %449 = vmatpush1.msra.mxu0 %v410
    %450 = vmatprep.subr.mxu0 0.0
    %451 = vmatpush1.msra.mxu0 %v411
    %452 = vmatprep.subr.mxu0 0.0
    %453 = vmatpush1.msra.mxu0 %v412
    %454 = vmatprep.subr.mxu0 0.0
    %455 = vmatpush1.msra.mxu0 %v413
    %456 = vmatprep.subr.mxu0 0.0
    %457 = vmatpush1.msra.mxu0 %v414
    %458 = vmatprep.subr.mxu0 0.0
    %459 = vmatpush1.msra.mxu0 %v415
    %460 = vmatprep.subr.mxu0 0.0
    %461 = vmatpush1.msra.mxu0 %v416
    %462 = vmatprep.subr.mxu0 0.0
    %463 = vmatpush1.msra.mxu0 %v417
    %464 = vmatprep.subr.mxu0 0.0
    %465 = vmatpush1.msra.mxu0 %v418
    %466 = vmatprep.subr.mxu0 0.0
    %467 = vmatpush1.msra.mxu0 %v419
    %468 = vmatprep.subr.mxu0 0.0
    %469 = vmatpush1.msra.mxu0 %v420
    %470 = vmatprep.subr.mxu0 0.0
    %471 = vmatpush1.msra.mxu0 %v421
    %472 = vmatprep.subr.mxu0 0.0
    %473 = vmatpush1.msra.mxu0 %v422
    %474 = vmatprep.subr.mxu0 0.0
    %475 = vmatpush1.msra.mxu0 %v423
    %476 = vmatprep.subr.mxu0 0.0
    %477 = vmatpush1.msra.mxu0 %v424
    %478 = vmatprep.subr.mxu0 0.0
    %479 = vmatpush1.msra.mxu0 %v425
    %480 = vmatprep.subr.mxu0 0.0
    %481 = vmatpush1.msra.mxu0 %v426
    %482 = vmatprep.subr.mxu0 0.0
    %483 = vmatpush1.msra.mxu0 %v427
    %484 = vmatprep.subr.mxu0 0.0
    %485 = vmatpush1.msra.mxu0 %v428
    %486 = vmatprep.subr.mxu0 0.0
    %487 = vmatpush1.msra.mxu0 %v429
    %488 = vmatprep.subr.mxu0 0.0
    %489 = vmatpush1.msra.mxu0 %v430
    %490 = vmatprep.subr.mxu0 0.0
    %491 = vmatpush1.msra.mxu0 %v431
    %492 = vmatprep.subr.mxu0 0.0
    %493 = vmatpush1.msra.mxu0 %v432
    %494 = vmatprep.subr.mxu0 0.0
    %495 = vmatpush1.msra.mxu0 %v433
    %496 = vmatprep.subr.mxu0 0.0
    %497 = vmatpush1.msra.mxu0 %v434
    %498 = vmatprep.subr.mxu0 0.0
    %499 = vmatpush1.msra.mxu0 %v435
    %500 = vmatprep.subr.mxu0 0.0
    %501 = vmatpush1.msra.mxu0 %v436
    %502 = vmatprep.subr.mxu0 0.0
    %503 = vmatpush1.msra.mxu0 %v437
    %504 = vmatprep.subr.mxu0 0.0
    %505 = vmatpush1.msra.mxu0 %v438
    %506 = vmatprep.subr.mxu0 0.0
    %507 = vmatpush1.msra.mxu0 %v439
    %508 = vmatprep.subr.mxu0 0.0
    %509 = vmatpush1.msra.mxu0 %v440
    %510 = vmatprep.mubr.f32.mxu0 %v408
    %511 = vmatmul.mubr.f32.gmra.mrb[0].mxu0 %v407
    %v512 = vpop.f32.mrb[0].mxu0
    %v513 = vadd.f32 %v445, %v512
    %v514 = vpop.f32.mrb[0].mxu0
    %515 = vdwg.mxu0
    %516 = vst [vmem:[%s7] sm:$0x3] %v513
    // Predicated region
    $region46: #{critic_forward.1} parent=1 // pred_check
      _
    $region47: #{critic_forward.1} parent=1 // pred_check_branch
      %518 = sbr.rel (0) target = $region49
    $region48: #{critic_forward.1} parent=1 // pred_region
      _
    $region49: #{critic_forward.1} parent=1 // pred_fallthru
      _
    // Predicated region
    $region50: #{critic_forward.1} parent=1 // pred_check
      _
    $region51: #{critic_forward.1} parent=1 // pred_check_branch
      %520 = sbr.rel (0) target = $region53
    $region52: #{critic_forward.1} parent=1 // pred_region
      _
    $region53: #{critic_forward.1} parent=1 // pred_fallthru
      _
    %521 = vsyncpa [#allocation3], 1
    %522 = vsyncpa [#allocation5], 1
    %523 = vsyncpa [#allocation8], 1

</llo_original>
